<compile_context>
chip_gen: v7x
topology: tpu7x:2x2x1
jax: 0.10.0
libtpu: 0.0.40
codegen_flags: <defaults>
</compile_context>

<pallas_src>
import functools

import jax
import jax.numpy as jnp
from jax import lax
from jax.experimental import pallas as pl
from jax.experimental.pallas import tpu as pltpu


# ---------------------------------------------------------------------------
# Static architecture constants (they imply fc1 = Linear(16 -> 32)).
# ---------------------------------------------------------------------------
CIN, H, W = 3, 16, 16                     # input image (NCHW at the JAX level)
K = 5                                     # conv kernel size ('valid' convs)
C1 = 8                                    # conv1 out channels
HC1, WC1 = H - K + 1, W - K + 1           # 12, 12   conv1 output
HP1, WP1 = HC1 // 2, WC1 // 2             # 6, 6     pool1 output
C2 = 16                                   # conv2 out channels
HC2, WC2 = HP1 - K + 1, WP1 - K + 1       # 2, 2     conv2 output
HP2, WP2 = HC2 // 2, WC2 // 2             # 1, 1     pool2 output
FEAT_IN = C2 * HP2 * WP2                  # 16       flatten -> fc1 input
HIDDEN = 32                               # feature dim (LocalModel split point)
NCLASS = 10

XROWS = 56                 # CIN*H = 48, padded so every 16-row patch window is in bounds
CONV1_K = K * CIN * W + 16 # 240 Toeplitz rows + 16 ones lanes (bias)           = 256
SEG2_W = C1 * WC1          # 96 lanes per conv2 patch segment (un-compacted map)
CONV2_K = K * SEG2_W + 16  # 480 Toeplitz rows + 16 ones lanes (bias)           = 496
FC1_K = C2 * WC2           # 31 pooled-map lanes + 1 ones lane                  = 32
FC1_N = HIDDEN + 16        # 32 features + constant-1 column + pad              = 48
NCLASS_PAD = 32            # logits padded to a nicer lane width
OUT_W = HIDDEN + NCLASS_PAD                                                   # 64

TB_MAX = 256               # batch block (per-step VMEM ~10 MiB: safe on v5e/v6e/v7x)

assert HP2 == 1 and WP2 == 1   # pool2 -> fc1 folding assumes the second pool is 1x1


# ---------------------------------------------------------------------------
# Fused forward kernel: one grid step = TB images, everything VMEM-resident.
# ---------------------------------------------------------------------------
def _fused_forward_kernel(x_ref, t1_ref, t2_ref, w1_ref, hw_ref, out_ref):
    bf16, f32 = jnp.bfloat16, jnp.float32
    tb = x_ref.shape[0]

    # ---- conv1 (+ bias) + ReLU: one Toeplitz matmul, M = tb*16 ---------------
    # patches1[b*16+p, dy*48 + ci*16 + u] = x[b, ci, p+dy, u]   (rows p>=12 garbage)
    segs1 = [x_ref[:, ci * H + dy: ci * H + dy + 16, :]
             for dy in range(K) for ci in range(CIN)]            # 15 x (tb,16,16) bf16
    segs1.append(jnp.ones((tb, 16, W), bf16))                    # ones -> bias row 240
    patches1 = jnp.concatenate(segs1, axis=2).reshape(tb * 16, CONV1_K)
    a1 = jnp.maximum(
        jnp.dot(patches1, t1_ref[...], preferred_element_type=f32), 0.0)  # (tb*16, 96)

    # ---- maxpool1 2x2/2: shifted pairwise maxima on the VPU (f32); the
    #      even-row / even-lane selection is folded into the conv2 weights.
    vm = jnp.maximum(a1[:tb * 16 - 1, :], a1[1:, :])             # valid at even rows p
    hm = jnp.maximum(vm[:, :C1 * WC1 - 1], vm[:, 1:])            # valid at lanes c*12+even
    hm = hm.astype(bf16)                                         # single cast for the MXU
    hm = jnp.concatenate([hm, jnp.zeros((tb * 16 - 1, 1), bf16)], axis=1)
    hm = jnp.concatenate([hm, jnp.zeros((1, SEG2_W), bf16)], axis=0)
    hm3 = hm.reshape(tb, 16, SEG2_W)                             # free, 16-row slabs

    # ---- conv2 (+ bias) + ReLU: M = tb*8 (valid rows j in {0, 2} per image) --
    segs2 = [hm3[:, 2 * dy: 2 * dy + 8, :] for dy in range(K)]   # 5 x (tb,8,96)
    segs2.append(jnp.ones((tb, 8, 16), bf16))                    # ones -> bias row 480
    patches2 = jnp.concatenate(segs2, axis=2).reshape(tb * 8, CONV2_K)
    a2 = jnp.maximum(
        jnp.dot(patches2, t2_ref[...], preferred_element_type=f32), 0.0)  # (tb*8, 32)

    # ---- maxpool2 2x2 -> 1x1 (valid: row 0 of each image, even lanes) --------
    vm2 = jnp.maximum(a2[:tb * 8 - 2, :], a2[2:, :])             # rows 0 vs 2 per image
    hm2 = jnp.maximum(vm2[:, :C2 * WC2 - 1], vm2[:, 1:])         # (tb*8-2, 31)
    d = jnp.concatenate([hm2, jnp.ones((tb * 8 - 2, 1), f32)], axis=1)   # ones -> fc1 bias
    d = jnp.concatenate([d, jnp.zeros((2, FC1_K), f32)], axis=0)         # (tb*8, 32)

    # ---- flatten + fc1 + ReLU (features), then head (logits) -----------------
    # fc1 weights carry the pool2 even-lane selection and feed a constant-1
    # column (col 32) through the ReLU so the head matmul can add its own bias.
    h = jnp.maximum(
        jnp.dot(d.astype(bf16), w1_ref[...], preferred_element_type=f32), 0.0)  # (tb*8, 48)
    y = jnp.dot(h.astype(bf16), hw_ref[...], preferred_element_type=f32)        # (tb*8, 32)

    out = jnp.concatenate([h[:, :HIDDEN], y], axis=1)            # (tb*8, 64) lane-dense
    out_ref[...] = out.reshape(tb, 8, OUT_W)                     # free, 8-row slabs


# ---------------------------------------------------------------------------
# Weight-side preprocessing (tiny, parameter-only; hoisted out of the hot path
# under jit with fixed weights).
# ---------------------------------------------------------------------------
def _conv_toeplitz(w, w_in, w_out):
    """[Cout,Cin,Kh,Kw] -> [Kh*Cin*w_in, Cout*w_out] so that a 'valid'
    cross-correlation is patches @ T, patch lanes ordered (dy, ci, u) and
    output lanes ordered (co, x): T[dy,ci,u, co,x] = w[co,ci,dy,u-x]."""
    cout, cin, kh, kw = w.shape
    du = jnp.arange(w_in)[:, None] - jnp.arange(w_out)[None, :]
    valid = ((du >= 0) & (du < kw)).astype(w.dtype)
    t = jnp.take(w, jnp.clip(du, 0, kw - 1).reshape(-1), axis=3)
    t = t.reshape(cout, cin, kh, w_in, w_out) * valid[None, None, None]
    return t.transpose(2, 1, 3, 0, 4).reshape(kh * cin * w_in, cout * w_out)


def _conv1_weight(w1, b1, dtype):
    t = _conv_toeplitz(w1.astype(jnp.float32), W, WC1)                  # (240, 96)
    bias = jnp.repeat(b1.astype(jnp.float32), WC1)[None, :]             # (1, 96)
    pad = jnp.zeros((CONV1_K - t.shape[0] - 1, t.shape[1]), jnp.float32)
    return jnp.concatenate([t, bias, pad], axis=0).astype(dtype)        # (256, 96)


def _conv2_weight(w2, b2, dtype):
    # Toeplitz on the compacted pooled map, re-expanded to the un-compacted lane
    # layout c1*12 + m (pooled values sit at even m <= 10); odd / out-of-range
    # lanes get zero rows, so the matmul performs the pool1 selection for free.
    t = _conv_toeplitz(w2.astype(jnp.float32), WP1, WC2)                # (240, 32)
    t = t.reshape(K, C1, WP1, C2 * WC2)
    body = jnp.zeros((K, C1, WC1, C2 * WC2), jnp.float32)
    body = body.at[:, :, 0:2 * WP1:2, :].set(t)
    body = body.reshape(K * SEG2_W, C2 * WC2)                           # (480, 32)
    bias = jnp.repeat(b2.astype(jnp.float32), WC2)[None, :]             # (1, 32)
    pad = jnp.zeros((CONV2_K - body.shape[0] - 1, body.shape[1]), jnp.float32)
    return jnp.concatenate([body, bias, pad], axis=0).astype(dtype)     # (496, 32)


def _fc1_weight(fc1_w, fc1_b, dtype):
    # LHS lanes: pool2 output at even lanes (2*c2), constant 1 at lane 31.
    w = jnp.zeros((FC1_K, FC1_N), jnp.float32)
    w = w.at[0:2 * FEAT_IN:2, 0:HIDDEN].set(fc1_w.astype(jnp.float32))
    w = w.at[FC1_K - 1, 0:HIDDEN].set(fc1_b.astype(jnp.float32))
    w = w.at[FC1_K - 1, HIDDEN].set(1.0)     # constant-1 column (survives the ReLU)
    return w.astype(dtype)                    # (32, 48)


def _head_weight(head_w, head_b, dtype):
    w = jnp.zeros((FC1_N, NCLASS_PAD), jnp.float32)
    w = w.at[0:HIDDEN, 0:NCLASS].set(head_w.astype(jnp.float32))
    w = w.at[HIDDEN, 0:NCLASS].set(head_b.astype(jnp.float32))          # bias via 1-lane
    return w.astype(dtype)                    # (48, 32)


# ---------------------------------------------------------------------------
# LocalModel forward: out = head(feature_extractor(x))  (features if feat=True)
# ---------------------------------------------------------------------------
def _fused_forward(params, x):
    b = x.shape[0]
    assert x.shape[1:] == (CIN, H, W), x.shape
    wdt = jnp.bfloat16                     # MXU operand dtype (f32 accumulation)

    t1e = _conv1_weight(params["conv1_w"], params["conv1_b"], wdt)      # (256, 96)
    t2e = _conv2_weight(params["conv2_w"], params["conv2_b"], wdt)      # (496, 32)
    w1e = _fc1_weight(params["fc1_w"], params["fc1_b"], wdt)            # (32, 48)
    hwe = _head_weight(params["head_w"], params["head_b"], wdt)         # (48, 32)

    tb = b if b <= TB_MAX else TB_MAX
    bp = ((b + tb - 1) // tb) * tb
    xr = x.reshape(b, CIN * H, W).astype(jnp.bfloat16)                  # rows = ci*H + h
    xr = jnp.pad(xr, ((0, bp - b), (0, XROWS - CIN * H), (0, 0)))

    out = pl.pallas_call(
        _fused_forward_kernel,
        out_shape=jax.ShapeDtypeStruct((bp, 8, OUT_W), jnp.float32),
        grid=(bp // tb,),
        in_specs=[
            pl.BlockSpec((tb, XROWS, W), lambda i: (i, 0, 0)),           # TB images / step
            pl.BlockSpec((CONV1_K, C1 * WC1), lambda i: (0, 0)),         # resident weights
            pl.BlockSpec((CONV2_K, C2 * WC2), lambda i: (0, 0)),
            pl.BlockSpec((FC1_K, FC1_N), lambda i: (0, 0)),
            pl.BlockSpec((FC1_N, NCLASS_PAD), lambda i: (0, 0)),
        ],
        out_specs=pl.BlockSpec((tb, 8, OUT_W), lambda i: (i, 0, 0)),
        compiler_params=pltpu.CompilerParams(
            dimension_semantics=("parallel",),
            vmem_limit_bytes=32 * 1024 * 1024),
    )(xr, t1e, t2e, w1e, hwe)

    res = out[:b, 0, :]                                                  # valid row / image
    return res[:, :HIDDEN], res[:, HIDDEN:HIDDEN + NCLASS]


@functools.partial(jax.jit, static_argnames=("feat",))
def local_model_forward(params, x, feat=False):
    feats, logits = _fused_forward(params, x)
    return feats if feat else logits


# ---------------------------------------------------------------------------
# Deterministic parameter init (shapes implied by the module split)
# ---------------------------------------------------------------------------
def init_params(key):
    ks = jax.random.split(key, 8)
    return {
        "conv1_w": 0.1 * jax.random.normal(ks[0], (C1, CIN, K, K), jnp.float32),
        "conv1_b": 0.1 * jax.random.normal(ks[1], (C1,), jnp.float32),
        "conv2_w": 0.1 * jax.random.normal(ks[2], (C2, C1, K, K), jnp.float32),
        "conv2_b": 0.1 * jax.random.normal(ks[3], (C2,), jnp.float32),
        "fc1_w": 0.1 * jax.random.normal(ks[4], (FEAT_IN, HIDDEN), jnp.float32),
        "fc1_b": 0.1 * jax.random.normal(ks[5], (HIDDEN,), jnp.float32),
        "head_w": 0.1 * jax.random.normal(ks[6], (HIDDEN, NCLASS), jnp.float32),
        "head_b": 0.1 * jax.random.normal(ks[7], (NCLASS,), jnp.float32),
    }


# ---------------------------------------------------------------------------
# Pure-JAX f32 reference (correctness check only)
# ---------------------------------------------------------------------------
def reference_forward(params, x, feat=False):
    def conv(xx, w, b):
        y = lax.conv_general_dilated(
            xx, w, window_strides=(1, 1), padding="VALID",
            dimension_numbers=("NCHW", "OIHW", "NCHW"))
        return jnp.maximum(y + b[None, :, None, None], 0.0)

    def pool(xx):
        return lax.reduce_window(
            xx, -jnp.inf, lax.max, (1, 1, 2, 2), (1, 1, 2, 2), "VALID")

    h = pool(conv(x, params["conv1_w"], params["conv1_b"]))
    h = pool(conv(h, params["conv2_w"], params["conv2_b"]))
    h = h.reshape(h.shape[0], -1)
    h = jnp.maximum(h @ params["fc1_w"] + params["fc1_b"], 0.0)
    if feat:
        return h
    return h @ params["head_w"] + params["head_b"]


if __name__ == "__main__":
    key = jax.random.PRNGKey(0)
    pkey, xkey = jax.random.split(key)
    params = init_params(pkey)
    x = jax.random.normal(xkey, (2, CIN, H, W), jnp.float32)   # NCHW, like PyTorch

    logits = jax.block_until_ready(local_model_forward(params, x, feat=False))
    feats = jax.block_until_ready(local_model_forward(params, x, feat=True))

    ref_logits = reference_forward(params, x, feat=False)
    ref_feats = reference_forward(params, x, feat=True)

    assert logits.shape == (2, NCLASS)
    assert feats.shape == (2, HIDDEN)
    # bf16 MXU operands with f32 accumulation -> compare to the f32 reference
    # with correspondingly loosened tolerances.
    assert jnp.allclose(logits, ref_logits, atol=5e-2, rtol=5e-2)
    assert jnp.allclose(feats, ref_feats, atol=5e-2, rtol=5e-2)

    print("KERNEL_OK")
</pallas_src>

<mosaic_0001>
module attributes {stable_mosaic.version = 11 : i64} {
  func.func @_fused_forward_kernel(%arg0: i32, %arg1: memref<2x56x16xbf16, #tpu.memory_space<vmem>>, %arg2: memref<256x96xbf16, #tpu.memory_space<vmem>>, %arg3: memref<496x32xbf16, #tpu.memory_space<vmem>>, %arg4: memref<32x48xbf16, #tpu.memory_space<vmem>>, %arg5: memref<48x32xbf16, #tpu.memory_space<vmem>>, %arg6: memref<2x8x64xf32, #tpu.memory_space<vmem>>) attributes {dimension_semantics = [#tpu.dimension_semantics<parallel>], iteration_bounds = array<i64: 1>, scalar_prefetch = 0 : i64, scratch_operands = 0 : i64, tpu.core_type = #tpu.core_type<tc>, window_params = [{transform_indices = @transform_0, window_bounds = array<i64: 2, 56, 16>}, {pipeline_mode = #tpu.pipeline_mode<synchronous>, transform_indices = @transform_1, window_bounds = array<i64: 256, 96>}, {pipeline_mode = #tpu.pipeline_mode<synchronous>, transform_indices = @transform_2, window_bounds = array<i64: 496, 32>}, {pipeline_mode = #tpu.pipeline_mode<synchronous>, transform_indices = @transform_3, window_bounds = array<i64: 32, 48>}, {pipeline_mode = #tpu.pipeline_mode<synchronous>, transform_indices = @transform_4, window_bounds = array<i64: 48, 32>}, {transform_indices = @transform_5, window_bounds = array<i64: 2, 8, 64>}]} {
    %c0 = arith.constant 0 : index
    %c0_0 = arith.constant 0 : index
    %c0_1 = arith.constant 0 : index
    %0 = vector.load %arg1[%c0, %c0_0, %c0_1] : memref<2x56x16xbf16, #tpu.memory_space<vmem>>, vector<2x16x16xbf16>
    %c0_2 = arith.constant 0 : index
    %c16 = arith.constant 16 : index
    %c0_3 = arith.constant 0 : index
    %1 = vector.load %arg1[%c0_2, %c16, %c0_3] : memref<2x56x16xbf16, #tpu.memory_space<vmem>>, vector<2x16x16xbf16>
    %c0_4 = arith.constant 0 : index
    %c32 = arith.constant 32 : index
    %c0_5 = arith.constant 0 : index
    %2 = vector.load %arg1[%c0_4, %c32, %c0_5] : memref<2x56x16xbf16, #tpu.memory_space<vmem>>, vector<2x16x16xbf16>
    %c0_6 = arith.constant 0 : index
    %c1 = arith.constant 1 : index
    %c0_7 = arith.constant 0 : index
    %3 = vector.load %arg1[%c0_6, %c1, %c0_7] : memref<2x56x16xbf16, #tpu.memory_space<vmem>>, vector<2x16x16xbf16>
    %c0_8 = arith.constant 0 : index
    %c17 = arith.constant 17 : index
    %c0_9 = arith.constant 0 : index
    %4 = vector.load %arg1[%c0_8, %c17, %c0_9] : memref<2x56x16xbf16, #tpu.memory_space<vmem>>, vector<2x16x16xbf16>
    %c0_10 = arith.constant 0 : index
    %c33 = arith.constant 33 : index
    %c0_11 = arith.constant 0 : index
    %5 = vector.load %arg1[%c0_10, %c33, %c0_11] : memref<2x56x16xbf16, #tpu.memory_space<vmem>>, vector<2x16x16xbf16>
    %c0_12 = arith.constant 0 : index
    %c2 = arith.constant 2 : index
    %c0_13 = arith.constant 0 : index
    %6 = vector.load %arg1[%c0_12, %c2, %c0_13] : memref<2x56x16xbf16, #tpu.memory_space<vmem>>, vector<2x16x16xbf16>
    %c0_14 = arith.constant 0 : index
    %c18 = arith.constant 18 : index
    %c0_15 = arith.constant 0 : index
    %7 = vector.load %arg1[%c0_14, %c18, %c0_15] : memref<2x56x16xbf16, #tpu.memory_space<vmem>>, vector<2x16x16xbf16>
    %c0_16 = arith.constant 0 : index
    %c34 = arith.constant 34 : index
    %c0_17 = arith.constant 0 : index
    %8 = vector.load %arg1[%c0_16, %c34, %c0_17] : memref<2x56x16xbf16, #tpu.memory_space<vmem>>, vector<2x16x16xbf16>
    %c0_18 = arith.constant 0 : index
    %c3 = arith.constant 3 : index
    %c0_19 = arith.constant 0 : index
    %9 = vector.load %arg1[%c0_18, %c3, %c0_19] : memref<2x56x16xbf16, #tpu.memory_space<vmem>>, vector<2x16x16xbf16>
    %c0_20 = arith.constant 0 : index
    %c19 = arith.constant 19 : index
    %c0_21 = arith.constant 0 : index
    %10 = vector.load %arg1[%c0_20, %c19, %c0_21] : memref<2x56x16xbf16, #tpu.memory_space<vmem>>, vector<2x16x16xbf16>
    %c0_22 = arith.constant 0 : index
    %c35 = arith.constant 35 : index
    %c0_23 = arith.constant 0 : index
    %11 = vector.load %arg1[%c0_22, %c35, %c0_23] : memref<2x56x16xbf16, #tpu.memory_space<vmem>>, vector<2x16x16xbf16>
    %c0_24 = arith.constant 0 : index
    %c4 = arith.constant 4 : index
    %c0_25 = arith.constant 0 : index
    %12 = vector.load %arg1[%c0_24, %c4, %c0_25] : memref<2x56x16xbf16, #tpu.memory_space<vmem>>, vector<2x16x16xbf16>
    %c0_26 = arith.constant 0 : index
    %c20 = arith.constant 20 : index
    %c0_27 = arith.constant 0 : index
    %13 = vector.load %arg1[%c0_26, %c20, %c0_27] : memref<2x56x16xbf16, #tpu.memory_space<vmem>>, vector<2x16x16xbf16>
    %c0_28 = arith.constant 0 : index
    %c36 = arith.constant 36 : index
    %c0_29 = arith.constant 0 : index
    %14 = vector.load %arg1[%c0_28, %c36, %c0_29] : memref<2x56x16xbf16, #tpu.memory_space<vmem>>, vector<2x16x16xbf16>
    %cst = arith.constant 1.000000e+00 : bf16
    %15 = vector.broadcast %cst : bf16 to vector<2x16x16xbf16>
    %16 = tpu.concatenate %0, %1, %2, %3, %4, %5, %6, %7, %8, %9, %10, %11, %12, %13, %14, %15 in 2 : vector<2x16x16xbf16>, vector<2x16x16xbf16>, vector<2x16x16xbf16>, vector<2x16x16xbf16>, vector<2x16x16xbf16>, vector<2x16x16xbf16>, vector<2x16x16xbf16>, vector<2x16x16xbf16>, vector<2x16x16xbf16>, vector<2x16x16xbf16>, vector<2x16x16xbf16>, vector<2x16x16xbf16>, vector<2x16x16xbf16>, vector<2x16x16xbf16>, vector<2x16x16xbf16>, vector<2x16x16xbf16> -> vector<2x16x256xbf16>
    %17 = vector.shape_cast %16 : vector<2x16x256xbf16> to vector<32x256xbf16>
    %c0_30 = arith.constant 0 : index
    %c0_31 = arith.constant 0 : index
    %18 = vector.load %arg2[%c0_30, %c0_31] : memref<256x96xbf16, #tpu.memory_space<vmem>>, vector<256x96xbf16>
    %cst_32 = arith.constant dense<0.000000e+00> : vector<32x96xf32>
    %19 = tpu.matmul %17, %18, %cst_32 {dimension_numbers = #tpu.dot_dimension_numbers<[1], [0], [0], [1], [0, 0, 1, 1], [], []>} : vector<32x256xbf16>, vector<256x96xbf16>, vector<32x96xf32> -> vector<32x96xf32>
    %cst_33 = arith.constant 0.000000e+00 : f32
    %20 = vector.broadcast %cst_33 : f32 to vector<32x96xf32>
    %21 = arith.maximumf %19, %20 : vector<32x96xf32>
    %22 = vector.extract_strided_slice %21 {offsets = [0, 0], sizes = [31, 96], strides = [1, 1]} : vector<32x96xf32> to vector<31x96xf32>
    %23 = vector.extract_strided_slice %21 {offsets = [1, 0], sizes = [31, 96], strides = [1, 1]} : vector<32x96xf32> to vector<31x96xf32>
    %24 = arith.maximumf %22, %23 : vector<31x96xf32>
    %25 = vector.extract_strided_slice %24 {offsets = [0, 0], sizes = [31, 95], strides = [1, 1]} : vector<31x96xf32> to vector<31x95xf32>
    %26 = vector.extract_strided_slice %24 {offsets = [0, 1], sizes = [31, 95], strides = [1, 1]} : vector<31x96xf32> to vector<31x95xf32>
    %27 = arith.maximumf %25, %26 : vector<31x95xf32>
    %28 = arith.truncf %27 : vector<31x95xf32> to vector<31x95xbf16>
    %cst_34 = arith.constant 0.000000e+00 : bf16
    %29 = vector.broadcast %cst_34 : bf16 to vector<31x1xbf16>
    %30 = tpu.concatenate %28, %29 in 1 : vector<31x95xbf16>, vector<31x1xbf16> -> vector<31x96xbf16>
    %cst_35 = arith.constant 0.000000e+00 : bf16
    %31 = vector.broadcast %cst_35 : bf16 to vector<1x96xbf16>
    %32 = tpu.concatenate %30, %31 in 0 : vector<31x96xbf16>, vector<1x96xbf16> -> vector<32x96xbf16>
    %33 = vector.shape_cast %32 : vector<32x96xbf16> to vector<2x16x96xbf16>
    %34 = vector.extract_strided_slice %33 {offsets = [0, 0, 0], sizes = [2, 8, 96], strides = [1, 1, 1]} : vector<2x16x96xbf16> to vector<2x8x96xbf16>
    %35 = vector.extract_strided_slice %33 {offsets = [0, 2, 0], sizes = [2, 8, 96], strides = [1, 1, 1]} : vector<2x16x96xbf16> to vector<2x8x96xbf16>
    %36 = vector.extract_strided_slice %33 {offsets = [0, 4, 0], sizes = [2, 8, 96], strides = [1, 1, 1]} : vector<2x16x96xbf16> to vector<2x8x96xbf16>
    %37 = vector.extract_strided_slice %33 {offsets = [0, 6, 0], sizes = [2, 8, 96], strides = [1, 1, 1]} : vector<2x16x96xbf16> to vector<2x8x96xbf16>
    %38 = vector.extract_strided_slice %33 {offsets = [0, 8, 0], sizes = [2, 8, 96], strides = [1, 1, 1]} : vector<2x16x96xbf16> to vector<2x8x96xbf16>
    %cst_36 = arith.constant 1.000000e+00 : bf16
    %39 = vector.broadcast %cst_36 : bf16 to vector<2x8x16xbf16>
    %40 = tpu.concatenate %34, %35, %36, %37, %38, %39 in 2 : vector<2x8x96xbf16>, vector<2x8x96xbf16>, vector<2x8x96xbf16>, vector<2x8x96xbf16>, vector<2x8x96xbf16>, vector<2x8x16xbf16> -> vector<2x8x496xbf16>
    %41 = vector.shape_cast %40 : vector<2x8x496xbf16> to vector<16x496xbf16>
    %c0_37 = arith.constant 0 : index
    %c0_38 = arith.constant 0 : index
    %42 = vector.load %arg3[%c0_37, %c0_38] : memref<496x32xbf16, #tpu.memory_space<vmem>>, vector<496x32xbf16>
    %cst_39 = arith.constant dense<0.000000e+00> : vector<16x32xf32>
    %43 = tpu.matmul %41, %42, %cst_39 {dimension_numbers = #tpu.dot_dimension_numbers<[1], [0], [0], [1], [0, 0, 1, 1], [], []>} : vector<16x496xbf16>, vector<496x32xbf16>, vector<16x32xf32> -> vector<16x32xf32>
    %cst_40 = arith.constant 0.000000e+00 : f32
    %44 = vector.broadcast %cst_40 : f32 to vector<16x32xf32>
    %45 = arith.maximumf %43, %44 : vector<16x32xf32>
    %46 = vector.extract_strided_slice %45 {offsets = [0, 0], sizes = [14, 32], strides = [1, 1]} : vector<16x32xf32> to vector<14x32xf32>
    %47 = vector.extract_strided_slice %45 {offsets = [2, 0], sizes = [14, 32], strides = [1, 1]} : vector<16x32xf32> to vector<14x32xf32>
    %48 = arith.maximumf %46, %47 : vector<14x32xf32>
    %49 = vector.extract_strided_slice %48 {offsets = [0, 0], sizes = [14, 31], strides = [1, 1]} : vector<14x32xf32> to vector<14x31xf32>
    %50 = vector.extract_strided_slice %48 {offsets = [0, 1], sizes = [14, 31], strides = [1, 1]} : vector<14x32xf32> to vector<14x31xf32>
    %51 = arith.maximumf %49, %50 : vector<14x31xf32>
    %cst_41 = arith.constant 1.000000e+00 : f32
    %52 = vector.broadcast %cst_41 : f32 to vector<14x1xf32>
    %53 = tpu.concatenate %51, %52 in 1 : vector<14x31xf32>, vector<14x1xf32> -> vector<14x32xf32>
    %cst_42 = arith.constant 0.000000e+00 : f32
    %54 = vector.broadcast %cst_42 : f32 to vector<2x32xf32>
    %55 = tpu.concatenate %53, %54 in 0 : vector<14x32xf32>, vector<2x32xf32> -> vector<16x32xf32>
    %56 = arith.truncf %55 : vector<16x32xf32> to vector<16x32xbf16>
    %c0_43 = arith.constant 0 : index
    %c0_44 = arith.constant 0 : index
    %57 = vector.load %arg4[%c0_43, %c0_44] : memref<32x48xbf16, #tpu.memory_space<vmem>>, vector<32x48xbf16>
    %cst_45 = arith.constant dense<0.000000e+00> : vector<16x48xf32>
    %58 = tpu.matmul %56, %57, %cst_45 {dimension_numbers = #tpu.dot_dimension_numbers<[1], [0], [0], [1], [0, 0, 1, 1], [], []>} : vector<16x32xbf16>, vector<32x48xbf16>, vector<16x48xf32> -> vector<16x48xf32>
    %cst_46 = arith.constant 0.000000e+00 : f32
    %59 = vector.broadcast %cst_46 : f32 to vector<16x48xf32>
    %60 = arith.maximumf %58, %59 : vector<16x48xf32>
    %61 = arith.truncf %60 : vector<16x48xf32> to vector<16x48xbf16>
    %c0_47 = arith.constant 0 : index
    %c0_48 = arith.constant 0 : index
    %62 = vector.load %arg5[%c0_47, %c0_48] : memref<48x32xbf16, #tpu.memory_space<vmem>>, vector<48x32xbf16>
    %cst_49 = arith.constant dense<0.000000e+00> : vector<16x32xf32>
    %63 = tpu.matmul %61, %62, %cst_49 {dimension_numbers = #tpu.dot_dimension_numbers<[1], [0], [0], [1], [0, 0, 1, 1], [], []>} : vector<16x48xbf16>, vector<48x32xbf16>, vector<16x32xf32> -> vector<16x32xf32>
    %64 = vector.extract_strided_slice %60 {offsets = [0, 0], sizes = [16, 32], strides = [1, 1]} : vector<16x48xf32> to vector<16x32xf32>
    %65 = tpu.concatenate %64, %63 in 1 : vector<16x32xf32>, vector<16x32xf32> -> vector<16x64xf32>
    %66 = vector.shape_cast %65 : vector<16x64xf32> to vector<2x8x64xf32>
    %c0_50 = arith.constant 0 : index
    %c0_51 = arith.constant 0 : index
    %c0_52 = arith.constant 0 : index
    %67 = vector.load %arg6[%c0_50, %c0_51, %c0_52] : memref<2x8x64xf32, #tpu.memory_space<vmem>>, vector<2x8x64xf32>
    tpu.vector_store %arg6[%c0_50, %c0_51, %c0_52], %66 {strides = array<i32>} : memref<2x8x64xf32, #tpu.memory_space<vmem>>, vector<2x8x64xf32>,
    return
  }
  func.func @transform_0(%arg0: i32) -> (i32, i32, i32) {
    %c0_i32 = arith.constant 0 : i32
    %c0_i32_0 = arith.constant 0 : i32
    %c0_i32_1 = arith.constant 0 : i32
    return %arg0, %c0_i32, %c0_i32_0 : i32, i32, i32
  }
  func.func @transform_1(%arg0: i32) -> (i32, i32) {
    %c0_i32 = arith.constant 0 : i32
    %c0_i32_0 = arith.constant 0 : i32
    %c0_i32_1 = arith.constant 0 : i32
    return %c0_i32, %c0_i32_0 : i32, i32
  }
  func.func @transform_2(%arg0: i32) -> (i32, i32) {
    %c0_i32 = arith.constant 0 : i32
    %c0_i32_0 = arith.constant 0 : i32
    %c0_i32_1 = arith.constant 0 : i32
    return %c0_i32, %c0_i32_0 : i32, i32
  }
  func.func @transform_3(%arg0: i32) -> (i32, i32) {
    %c0_i32 = arith.constant 0 : i32
    %c0_i32_0 = arith.constant 0 : i32
    %c0_i32_1 = arith.constant 0 : i32
    return %c0_i32, %c0_i32_0 : i32, i32
  }
  func.func @transform_4(%arg0: i32) -> (i32, i32) {
    %c0_i32 = arith.constant 0 : i32
    %c0_i32_0 = arith.constant 0 : i32
    %c0_i32_1 = arith.constant 0 : i32
    return %c0_i32, %c0_i32_0 : i32, i32
  }
  func.func @transform_5(%arg0: i32) -> (i32, i32, i32) {
    %c0_i32 = arith.constant 0 : i32
    %c0_i32_0 = arith.constant 0 : i32
    %c0_i32_1 = arith.constant 0 : i32
    return %arg0, %c0_i32, %c0_i32_0 : i32, i32, i32
  }
}

</mosaic_0001>

<llo_original>
// kernel: local_model_forward.1
$region0: #{local_model_forward.1}
  #allocation0 [shape = 'u32[]', space=smem, size = 0x4, offset = 0x4, fixed_abs, tag = 'smem constant byte address 0x4 - core index']
  #allocation1 [shape = 'u32[144,128]{1,0:T(1,128)}', space=vmem, size = 0x12000, scoped, tag = 'internal scratch']
  %s0 = inlined_call_operand.vmem [shape: bf16[2,56,16], index: 0, kind: input, shape index: {}]
  %s1 = inlined_call_operand.vmem [shape: bf16[256,96], index: 1, kind: input, shape index: {}]
  %s2 = inlined_call_operand.vmem [shape: bf16[496,32], index: 2, kind: input, shape index: {}]
  %s3 = inlined_call_operand.vmem [shape: bf16[32,48], index: 3, kind: input, shape index: {}]
  %s4 = inlined_call_operand.vmem [shape: bf16[48,32], index: 4, kind: input, shape index: {}]
  %s5 = inlined_call_operand.vmem [shape: f32[2,8,64], index: 5, kind: output, shape index: {}]
  %s6 = sld [smem:[#allocation0]]
  $region30: #{local_model_forward.1} parent=0
    _
  %s8 = ssub.s32 1, %s6
  %s9 = scalar_select 0, %s8, %s6
  // Predicated region
  $region2: #{local_model_forward.1} parent=0 // pred_check
    _
  $region3: #{local_model_forward.1} parent=0 // pred_check_branch
    %11 = sbr.rel (0) target = $region5
  $region4: #{local_model_forward.1} parent=0 // pred_region
    _
  $region5: #{local_model_forward.1} parent=0 // pred_fallthru
    _
  // Predicated region
  $region6: #{local_model_forward.1} parent=0 // pred_check
    _
  $region7: #{local_model_forward.1} parent=0 // pred_check_branch
    %13 = sbr.rel (0) target = $region9
  $region8: #{local_model_forward.1} parent=0 // pred_region
    _
  $region9: #{local_model_forward.1} parent=0 // pred_fallthru
    _
  // Predicated region
  $region10: #{local_model_forward.1} parent=0 // pred_check
    _
  $region11: #{local_model_forward.1} parent=0 // pred_check_branch
    %15 = sbr.rel (0) target = $region13
  $region12: #{local_model_forward.1} parent=0 // pred_region
    _
  $region13: #{local_model_forward.1} parent=0 // pred_fallthru
    _
  // Predicated region
  $region14: #{local_model_forward.1} parent=0 // pred_check
    _
  $region15: #{local_model_forward.1} parent=0 // pred_check_branch
    %17 = sbr.rel (0) target = $region17
  $region16: #{local_model_forward.1} parent=0 // pred_region
    _
  $region17: #{local_model_forward.1} parent=0 // pred_fallthru
    _
  // Predicated region
  $region18: #{local_model_forward.1} parent=0 // pred_check
    _
  $region19: #{local_model_forward.1} parent=0 // pred_check_branch
    %19 = sbr.rel (0) target = $region21
  $region20: #{local_model_forward.1} parent=0 // pred_region
    _
  $region21: #{local_model_forward.1} parent=0 // pred_fallthru
    _
  %v22 = vld [vmem:[%s0] sm:$0xf]
  %v23 = vld [vmem:[%s0 + $0x4] sm:$0xf]
  %v24 = vld [vmem:[%s0 + $0x1c] sm:$0xf]
  %v25 = vld [vmem:[%s0 + $0x20] sm:$0xf]
  %v26 = vld [vmem:[%s0 + $0x8] sm:$0xf]
  %v27 = vld [vmem:[%s0 + $0xc] sm:$0xf]
  %v28 = vld [vmem:[%s0 + $0x24] sm:$0xf]
  %v29 = vld [vmem:[%s0 + $0x28] sm:$0xf]
  %v30 = vld [vmem:[%s0 + $0x10] sm:$0xf]
  %v31 = vld [vmem:[%s0 + $0x14] sm:$0xf]
  %v32 = vld [vmem:[%s0 + $0x2c] sm:$0xf]
  %v33 = vld [vmem:[%s0 + $0x30] sm:$0xf]
  %v34 = vld [vmem:[%s0 + $0x8] sm:$0x1]
  %v35 = vld [vmem:[%s0 + $0x24] sm:$0x1]
  %v36 = vld [vmem:[%s0 + $0x10] sm:$0x1]
  %v37 = vld [vmem:[%s0 + $0x2c] sm:$0x1]
  %v38 = vld [vmem:[%s0 + $0x18] sm:$0x1]
  %v39 = vld [vmem:[%s0 + $0x34] sm:$0x1]
  %v40 = vld [vmem:[%s0] sm:$0xe]
  %v41 = vld [vmem:[%s0 + $0x1c] sm:$0xe]
  %v42 = vld [vmem:[%s0 + $0x8] sm:$0xe]
  %v43 = vld [vmem:[%s0 + $0x24] sm:$0xe]
  %v44 = vld [vmem:[%s0 + $0x10] sm:$0xe]
  %v45 = vld [vmem:[%s0 + $0x2c] sm:$0xe]
  %v46 = vld [vmem:[%s0 + $0x8] sm:$0x3]
  %v47 = vld [vmem:[%s0 + $0x24] sm:$0x3]
  %v48 = vld [vmem:[%s0 + $0x10] sm:$0x3]
  %v49 = vld [vmem:[%s0 + $0x2c] sm:$0x3]
  %v50 = vld [vmem:[%s0 + $0x18] sm:$0x3]
  %v51 = vld [vmem:[%s0 + $0x34] sm:$0x3]
  %v52 = vld [vmem:[%s0] sm:$0xc]
  %v53 = vld [vmem:[%s0 + $0x1c] sm:$0xc]
  %v54 = vld [vmem:[%s0 + $0x8] sm:$0xc]
  %v55 = vld [vmem:[%s0 + $0x24] sm:$0xc]
  %v56 = vld [vmem:[%s0 + $0x10] sm:$0xc]
  %v57 = vld [vmem:[%s0 + $0x2c] sm:$0xc]
  %v62 = vunpack.c.l.b16 %v22
  %v63 = vunpack.c.l.b16 %v23
  %v64 = vunpack.c.l.b16 %v24
  %v65 = vunpack.c.l.b16 %v25
  %v66 = vpack.c.b16 %v63, %v62
  %v67 = vpack.c.b16 %v65, %v64
  %v72 = vunpack.c.l.b16 %v26
  %v73 = vunpack.c.l.b16 %v27
  %v74 = vunpack.c.l.b16 %v28
  %v75 = vunpack.c.l.b16 %v29
  %v76 = vpack.c.b16 %v73, %v72
  %v77 = vpack.c.b16 %v75, %v74
  %78 = vrot.lane.b32.xlu0 %v76, 16
  %v79 = vpop.permute.xlu0 %78
  %80 = vrot.lane.b32.xlu0 %v77, 16
  %v81 = vpop.permute.xlu0 %80
  %v86 = vunpack.c.l.b16 %v30
  %v87 = vunpack.c.l.b16 %v31
  %v88 = vunpack.c.l.b16 %v32
  %v89 = vunpack.c.l.b16 %v33
  %v90 = vpack.c.b16 %v87, %v86
  %v91 = vpack.c.b16 %v89, %v88
  %92 = vrot.lane.b32.xlu0 %v90, 32
  %v93 = vpop.permute.xlu0 %92
  %94 = vrot.lane.b32.xlu0 %v91, 32
  %v95 = vpop.permute.xlu0 %94
  %v98 = vunpack.c.l.b16 %v34
  %v99 = vunpack.c.l.b16 %v35
  %v100 = vpack.c.b16 %v98, %v98
  %v101 = vpack.c.b16 %v99, %v99
  %vm102 = vsmask.f32 7424
  %v104 = vshrl.u32 %v66, 16
  %v106 = vshll.u32 %v66, 16
  %v108 = vrot.slane %v106, 1
  %v109 = vor.u32 %v104, %v108
  %v111 = vshll.u32 %v100, 16
  %v113 = vrot.slane %v111, 1
  %v114 = vsel %vm102, %v109, %v113
  %v116 = vshrl.u32 %v67, 16
  %v118 = vshll.u32 %v67, 16
  %v120 = vrot.slane %v118, 1
  %v121 = vor.u32 %v116, %v120
  %v123 = vshll.u32 %v101, 16
  %v125 = vrot.slane %v123, 1
  %v126 = vsel %vm102, %v121, %v125
  %127 = vrot.lane.b32.xlu0 %v114, 48
  %v128 = vpop.permute.xlu0 %127
  %129 = vrot.lane.b32.xlu0 %v126, 48
  %v130 = vpop.permute.xlu0 %129
  %v133 = vunpack.c.l.b16 %v36
  %v134 = vunpack.c.l.b16 %v37
  %v135 = vpack.c.b16 %v133, %v133
  %v136 = vpack.c.b16 %v134, %v134
  %v138 = vshrl.u32 %v76, 16
  %v140 = vshll.u32 %v76, 16
  %v142 = vrot.slane %v140, 1
  %v143 = vor.u32 %v138, %v142
  %v145 = vshll.u32 %v135, 16
  %v147 = vrot.slane %v145, 1
  %v148 = vsel %vm102, %v143, %v147
  %v150 = vshrl.u32 %v77, 16
  %v152 = vshll.u32 %v77, 16
  %v154 = vrot.slane %v152, 1
  %v155 = vor.u32 %v150, %v154
  %v157 = vshll.u32 %v136, 16
  %v159 = vrot.slane %v157, 1
  %v160 = vsel %vm102, %v155, %v159
  %161 = vrot.lane.b32.xlu0 %v148, 64
  %v162 = vpop.permute.xlu0 %161
  %163 = vrot.lane.b32.xlu0 %v160, 64
  %v164 = vpop.permute.xlu0 %163
  %v167 = vunpack.c.l.b16 %v38
  %v168 = vunpack.c.l.b16 %v39
  %v169 = vpack.c.b16 %v167, %v167
  %v170 = vpack.c.b16 %v168, %v168
  %v172 = vshrl.u32 %v90, 16
  %v174 = vshll.u32 %v90, 16
  %v176 = vrot.slane %v174, 1
  %v177 = vor.u32 %v172, %v176
  %v179 = vshll.u32 %v169, 16
  %v181 = vrot.slane %v179, 1
  %v182 = vsel %vm102, %v177, %v181
  %v184 = vshrl.u32 %v91, 16
  %v186 = vshll.u32 %v91, 16
  %v188 = vrot.slane %v186, 1
  %v189 = vor.u32 %v184, %v188
  %v191 = vshll.u32 %v170, 16
  %v193 = vrot.slane %v191, 1
  %v194 = vsel %vm102, %v189, %v193
  %195 = vrot.lane.b32.xlu0 %v182, 80
  %v196 = vpop.permute.xlu0 %195
  %197 = vrot.lane.b32.xlu0 %v194, 80
  %v198 = vpop.permute.xlu0 %197
  %v201 = vunpack.c.l.b16 %v40
  %v202 = vunpack.c.l.b16 %v41
  %v203 = vpack.c.b16 %v63, %v201
  %v204 = vpack.c.b16 %v65, %v202
  %vm205 = vcmask 1046528
  %v206 = vrot.slane %v203, 1
  %v207 = vrot.slane %v100, 1
  %v208 = vsel %vm205, %v206, %v207
  %v209 = vrot.slane %v204, 1
  %v210 = vrot.slane %v101, 1
  %v211 = vsel %vm205, %v209, %v210
  %212 = vrot.lane.b32.xlu0 %v208, 96
  %v213 = vpop.permute.xlu0 %212
  %214 = vrot.lane.b32.xlu0 %v211, 96
  %v215 = vpop.permute.xlu0 %214
  %v218 = vunpack.c.l.b16 %v42
  %v219 = vunpack.c.l.b16 %v43
  %v220 = vpack.c.b16 %v73, %v218
  %v221 = vpack.c.b16 %v75, %v219
  %v222 = vrot.slane %v220, 1
  %v223 = vrot.slane %v135, 1
  %v224 = vsel %vm205, %v222, %v223
  %v225 = vrot.slane %v221, 1
  %v226 = vrot.slane %v136, 1
  %v227 = vsel %vm205, %v225, %v226
  %228 = vrot.lane.b32.xlu0 %v224, 112
  %v229 = vpop.permute.xlu0 %228
  %230 = vrot.lane.b32.xlu0 %v227, 112
  %v231 = vpop.permute.xlu0 %230
  %v234 = vunpack.c.l.b16 %v44
  %v235 = vunpack.c.l.b16 %v45
  %v236 = vpack.c.b16 %v87, %v234
  %v237 = vpack.c.b16 %v89, %v235
  %v238 = vrot.slane %v236, 1
  %v239 = vrot.slane %v169, 1
  %v240 = vsel %vm205, %v238, %v239
  %v241 = vrot.slane %v237, 1
  %v242 = vrot.slane %v170, 1
  %v243 = vsel %vm205, %v241, %v242
  %v246 = vunpack.c.l.b16 %v46
  %v247 = vunpack.c.l.b16 %v47
  %v248 = vpack.c.b16 %v246, %v246
  %v249 = vpack.c.b16 %v247, %v247
  %vm250 = vsmask.f32 6400
  %v252 = vshrl.u32 %v203, 16
  %v254 = vrot.slane %v252, 1
  %v255 = vshll.u32 %v203, 16
  %v257 = vrot.slane %v255, 2
  %v258 = vor.u32 %v254, %v257
  %v260 = vshrl.u32 %v248, 16
  %v262 = vrot.slane %v260, 1
  %v263 = vshll.u32 %v248, 16
  %v265 = vrot.slane %v263, 2
  %v266 = vor.u32 %v262, %v265
  %v267 = vsel %vm250, %v258, %v266
  %v269 = vshrl.u32 %v204, 16
  %v271 = vrot.slane %v269, 1
  %v272 = vshll.u32 %v204, 16
  %v274 = vrot.slane %v272, 2
  %v275 = vor.u32 %v271, %v274
  %v277 = vshrl.u32 %v249, 16
  %v279 = vrot.slane %v277, 1
  %v280 = vshll.u32 %v249, 16
  %v282 = vrot.slane %v280, 2
  %v283 = vor.u32 %v279, %v282
  %v284 = vsel %vm250, %v275, %v283
  %285 = vrot.lane.b32.xlu0 %v267, 16
  %v286 = vpop.permute.xlu0 %285
  %287 = vrot.lane.b32.xlu0 %v284, 16
  %v288 = vpop.permute.xlu0 %287
  %v291 = vunpack.c.l.b16 %v48
  %v292 = vunpack.c.l.b16 %v49
  %v293 = vpack.c.b16 %v291, %v291
  %v294 = vpack.c.b16 %v292, %v292
  %v296 = vshrl.u32 %v220, 16
  %v298 = vrot.slane %v296, 1
  %v299 = vshll.u32 %v220, 16
  %v301 = vrot.slane %v299, 2
  %v302 = vor.u32 %v298, %v301
  %v304 = vshrl.u32 %v293, 16
  %v306 = vrot.slane %v304, 1
  %v307 = vshll.u32 %v293, 16
  %v309 = vrot.slane %v307, 2
  %v310 = vor.u32 %v306, %v309
  %v311 = vsel %vm250, %v302, %v310
  %v313 = vshrl.u32 %v221, 16
  %v315 = vrot.slane %v313, 1
  %v316 = vshll.u32 %v221, 16
  %v318 = vrot.slane %v316, 2
  %v319 = vor.u32 %v315, %v318
  %v321 = vshrl.u32 %v294, 16
  %v323 = vrot.slane %v321, 1
  %v324 = vshll.u32 %v294, 16
  %v326 = vrot.slane %v324, 2
  %v327 = vor.u32 %v323, %v326
  %v328 = vsel %vm250, %v319, %v327
  %329 = vrot.lane.b32.xlu0 %v311, 32
  %v330 = vpop.permute.xlu0 %329
  %331 = vrot.lane.b32.xlu0 %v328, 32
  %v332 = vpop.permute.xlu0 %331
  %v335 = vunpack.c.l.b16 %v50
  %v336 = vunpack.c.l.b16 %v51
  %v337 = vpack.c.b16 %v335, %v335
  %v338 = vpack.c.b16 %v336, %v336
  %v340 = vshrl.u32 %v236, 16
  %v342 = vrot.slane %v340, 1
  %v343 = vshll.u32 %v236, 16
  %v345 = vrot.slane %v343, 2
  %v346 = vor.u32 %v342, %v345
  %v348 = vshrl.u32 %v337, 16
  %v350 = vrot.slane %v348, 1
  %v351 = vshll.u32 %v337, 16
  %v353 = vrot.slane %v351, 2
  %v354 = vor.u32 %v350, %v353
  %v355 = vsel %vm250, %v346, %v354
  %v357 = vshrl.u32 %v237, 16
  %v359 = vrot.slane %v357, 1
  %v360 = vshll.u32 %v237, 16
  %v362 = vrot.slane %v360, 2
  %v363 = vor.u32 %v359, %v362
  %v365 = vshrl.u32 %v338, 16
  %v367 = vrot.slane %v365, 1
  %v368 = vshll.u32 %v338, 16
  %v370 = vrot.slane %v368, 2
  %v371 = vor.u32 %v367, %v370
  %v372 = vsel %vm250, %v363, %v371
  %373 = vrot.lane.b32.xlu0 %v355, 48
  %v374 = vpop.permute.xlu0 %373
  %375 = vrot.lane.b32.xlu0 %v372, 48
  %v376 = vpop.permute.xlu0 %375
  %v379 = vunpack.c.l.b16 %v52
  %v380 = vunpack.c.l.b16 %v53
  %v381 = vpack.c.b16 %v63, %v379
  %v382 = vpack.c.b16 %v65, %v380
  %vm383 = vcmask 1045504
  %v384 = vrot.slane %v381, 2
  %v385 = vrot.slane %v248, 2
  %v386 = vsel %vm383, %v384, %v385
  %v387 = vrot.slane %v382, 2
  %v388 = vrot.slane %v249, 2
  %v389 = vsel %vm383, %v387, %v388
  %390 = vrot.lane.b32.xlu0 %v386, 64
  %v391 = vpop.permute.xlu0 %390
  %392 = vrot.lane.b32.xlu0 %v389, 64
  %v393 = vpop.permute.xlu0 %392
  %v396 = vunpack.c.l.b16 %v54
  %v397 = vunpack.c.l.b16 %v55
  %v398 = vpack.c.b16 %v73, %v396
  %v399 = vpack.c.b16 %v75, %v397
  %v400 = vrot.slane %v398, 2
  %v401 = vrot.slane %v293, 2
  %v402 = vsel %vm383, %v400, %v401
  %v403 = vrot.slane %v399, 2
  %v404 = vrot.slane %v294, 2
  %v405 = vsel %vm383, %v403, %v404
  %406 = vrot.lane.b32.xlu0 %v402, 80
  %v407 = vpop.permute.xlu0 %406
  %408 = vrot.lane.b32.xlu0 %v405, 80
  %v409 = vpop.permute.xlu0 %408
  %v412 = vunpack.c.l.b16 %v56
  %v413 = vunpack.c.l.b16 %v57
  %v414 = vpack.c.b16 %v87, %v412
  %v415 = vpack.c.b16 %v89, %v413
  %v416 = vrot.slane %v414, 2
  %v417 = vrot.slane %v337, 2
  %v418 = vsel %vm383, %v416, %v417
  %v419 = vrot.slane %v415, 2
  %v420 = vrot.slane %v338, 2
  %v421 = vsel %vm383, %v419, %v420
  %422 = vrot.lane.b32.xlu0 %v418, 96
  %v423 = vpop.permute.xlu0 %422
  %424 = vrot.lane.b32.xlu0 %v421, 96
  %v425 = vpop.permute.xlu0 %424
  %vm426 = vcmask 130048
  %v428 = vsel %vm426, %v66, %v79
  %v430 = vsel %vm426, %v67, %v81
  %vm431 = vcmask 261120
  %v433 = vsel %vm431, %v428, %v93
  %v435 = vsel %vm431, %v430, %v95
  %vm436 = vcmask 392192
  %v438 = vsel %vm436, %v433, %v128
  %v440 = vsel %vm436, %v435, %v130
  %vm441 = vcmask 523264
  %v443 = vsel %vm441, %v438, %v162
  %v445 = vsel %vm441, %v440, %v164
  %vm446 = vcmask 654336
  %v448 = vsel %vm446, %v443, %v196
  %v450 = vsel %vm446, %v445, %v198
  %vm451 = vcmask 785408
  %v453 = vsel %vm451, %v448, %v213
  %v455 = vsel %vm451, %v450, %v215
  %vm456 = vcmask 916480
  %v458 = vsel %vm456, %v453, %v229
  %v461 = vsel %vm456, %v455, %v231
  %v465 = vsel %vm426, %v240, %v286
  %v468 = vsel %vm426, %v243, %v288
  %v470 = vsel %vm431, %v465, %v330
  %v472 = vsel %vm431, %v468, %v332
  %v474 = vsel %vm436, %v470, %v374
  %v476 = vsel %vm436, %v472, %v376
  %v478 = vsel %vm441, %v474, %v391
  %v480 = vsel %vm441, %v476, %v393
  %v482 = vsel %vm446, %v478, %v407
  %v484 = vsel %vm446, %v480, %v409
  %v486 = vsel %vm451, %v482, %v423
  %v488 = vsel %vm451, %v484, %v425
  %v490 = vsel %vm456, %v486, 1065369472
  %v492 = vsel %vm456, %v488, 1065369472
  %v494 = vld [vmem:[%s1] sm:$0xf]
  %v495 = vld [vmem:[%s1 + $0x4] sm:$0xf]
  %v496 = vld [vmem:[%s1 + $0x8] sm:$0xf]
  %v497 = vld [vmem:[%s1 + $0xc] sm:$0xf]
  %v498 = vld [vmem:[%s1 + $0x10] sm:$0xf]
  %v499 = vld [vmem:[%s1 + $0x14] sm:$0xf]
  %v500 = vld [vmem:[%s1 + $0x18] sm:$0xf]
  %v501 = vld [vmem:[%s1 + $0x1c] sm:$0xf]
  %v502 = vld [vmem:[%s1 + $0x20] sm:$0xf]
  %v503 = vld [vmem:[%s1 + $0x24] sm:$0xf]
  %v504 = vld [vmem:[%s1 + $0x28] sm:$0xf]
  %v505 = vld [vmem:[%s1 + $0x2c] sm:$0xf]
  %v506 = vld [vmem:[%s1 + $0x30] sm:$0xf]
  %v507 = vld [vmem:[%s1 + $0x34] sm:$0xf]
  %v508 = vld [vmem:[%s1 + $0x38] sm:$0xf]
  %v509 = vld [vmem:[%s1 + $0x3c] sm:$0xf]
  %v510 = vld [vmem:[%s1 + $0x40] sm:$0xf]
  %v511 = vld [vmem:[%s1 + $0x44] sm:$0xf]
  %v512 = vld [vmem:[%s1 + $0x48] sm:$0xf]
  %v513 = vld [vmem:[%s1 + $0x4c] sm:$0xf]
  %v514 = vld [vmem:[%s1 + $0x50] sm:$0xf]
  %v515 = vld [vmem:[%s1 + $0x54] sm:$0xf]
  %v516 = vld [vmem:[%s1 + $0x58] sm:$0xf]
  %v517 = vld [vmem:[%s1 + $0x5c] sm:$0xf]
  %v518 = vld [vmem:[%s1 + $0x60] sm:$0xf]
  %v519 = vld [vmem:[%s1 + $0x64] sm:$0xf]
  %v520 = vld [vmem:[%s1 + $0x68] sm:$0xf]
  %v521 = vld [vmem:[%s1 + $0x6c] sm:$0xf]
  %v522 = vld [vmem:[%s1 + $0x70] sm:$0xf]
  %v523 = vld [vmem:[%s1 + $0x74] sm:$0xf]
  %v524 = vld [vmem:[%s1 + $0x78] sm:$0xf]
  %v525 = vld [vmem:[%s1 + $0x7c] sm:$0xf]
  %v558 = vunpack.c.l.b16 %v494
  %v559 = vunpack.c.l.b16 %v495
  %v560 = vunpack.c.l.b16 %v496
  %v561 = vunpack.c.l.b16 %v497
  %v562 = vunpack.c.l.b16 %v498
  %v563 = vunpack.c.l.b16 %v499
  %v564 = vunpack.c.l.b16 %v500
  %v565 = vunpack.c.l.b16 %v501
  %v566 = vunpack.c.l.b16 %v502
  %v567 = vunpack.c.l.b16 %v503
  %v568 = vunpack.c.l.b16 %v504
  %v569 = vunpack.c.l.b16 %v505
  %v570 = vunpack.c.l.b16 %v506
  %v571 = vunpack.c.l.b16 %v507
  %v572 = vunpack.c.l.b16 %v508
  %v573 = vunpack.c.l.b16 %v509
  %v574 = vunpack.c.l.b16 %v510
  %v575 = vunpack.c.l.b16 %v511
  %v576 = vunpack.c.l.b16 %v512
  %v577 = vunpack.c.l.b16 %v513
  %v578 = vunpack.c.l.b16 %v514
  %v579 = vunpack.c.l.b16 %v515
  %v580 = vunpack.c.l.b16 %v516
  %v581 = vunpack.c.l.b16 %v517
  %v582 = vunpack.c.l.b16 %v518
  %v583 = vunpack.c.l.b16 %v519
  %v584 = vunpack.c.l.b16 %v520
  %v585 = vunpack.c.l.b16 %v521
  %v586 = vunpack.c.l.b16 %v522
  %v587 = vunpack.c.l.b16 %v523
  %v588 = vunpack.c.l.b16 %v524
  %v589 = vunpack.c.l.b16 %v525
  %v590 = vpack.c.b16 %v559, %v558
  %v591 = vpack.c.b16 %v561, %v560
  %v592 = vpack.c.b16 %v563, %v562
  %v593 = vpack.c.b16 %v565, %v564
  %v594 = vpack.c.b16 %v567, %v566
  %v595 = vpack.c.b16 %v569, %v568
  %v596 = vpack.c.b16 %v571, %v570
  %v597 = vpack.c.b16 %v573, %v572
  %v598 = vpack.c.b16 %v575, %v574
  %v599 = vpack.c.b16 %v577, %v576
  %v600 = vpack.c.b16 %v579, %v578
  %v601 = vpack.c.b16 %v581, %v580
  %v602 = vpack.c.b16 %v583, %v582
  %v603 = vpack.c.b16 %v585, %v584
  %v604 = vpack.c.b16 %v587, %v586
  %v605 = vpack.c.b16 %v589, %v588
  %622 = vmatprep.subr.bf16.mxu0 0
  %623 = vmatpush1.bf16.msra.mxu0 %v590
  %624 = vmatprep.subr.bf16.mxu0 0
  %625 = vmatpush1.bf16.msra.mxu0 %v591
  %626 = vmatprep.subr.bf16.mxu0 0
  %627 = vmatpush1.bf16.msra.mxu0 %v592
  %628 = vmatprep.subr.bf16.mxu0 0
  %629 = vmatpush1.bf16.msra.mxu0 %v593
  %630 = vmatprep.subr.bf16.mxu0 0
  %631 = vmatpush1.bf16.msra.mxu0 %v594
  %632 = vmatprep.subr.bf16.mxu0 0
  %633 = vmatpush1.bf16.msra.mxu0 %v595
  %634 = vmatprep.subr.bf16.mxu0 0
  %635 = vmatpush1.bf16.msra.mxu0 %v596
  %636 = vmatprep.subr.bf16.mxu0 0
  %637 = vmatpush1.bf16.msra.mxu0 %v597
  %638 = vmatprep.subr.bf16.mxu0 0
  %639 = vmatpush1.bf16.msra.mxu0 %v598
  %640 = vmatprep.subr.bf16.mxu0 0
  %641 = vmatpush1.bf16.msra.mxu0 %v599
  %642 = vmatprep.subr.bf16.mxu0 0
  %643 = vmatpush1.bf16.msra.mxu0 %v600
  %644 = vmatprep.subr.bf16.mxu0 0
  %645 = vmatpush1.bf16.msra.mxu0 %v601
  %646 = vmatprep.subr.bf16.mxu0 0
  %647 = vmatpush1.bf16.msra.mxu0 %v602
  %648 = vmatprep.subr.bf16.mxu0 0
  %649 = vmatpush1.bf16.msra.mxu0 %v603
  %650 = vmatprep.subr.bf16.mxu0 0
  %651 = vmatpush1.bf16.msra.mxu0 %v604
  %652 = vmatprep.subr.bf16.mxu0 0
  %653 = vmatpush1.bf16.msra.mxu0 %v605
  %654 = vmatprep.mubr.bf16.mxu0 %v490
  %655 = vmatmul.mubr.bf16.gmra.mrb[0].mxu0 %v458
  %v656 = vpop.f32.mrb[0].mxu0
  %v657 = vadd.f32 0.0, %v656
  %v658 = vpop.f32.mrb[0].mxu0
  %v659 = vpop.f32.mrb[0].mxu0
  %v660 = vadd.f32 0.0, %v659
  %v661 = vpop.f32.mrb[0].mxu0
  %662 = vmatprep.mubr.bf16.mxu0 %v492
  %663 = vmatmul.mubr.bf16.gmra.mrb[0].mxu0 %v461
  %v664 = vpop.f32.mrb[0].mxu0
  %v665 = vadd.f32 0.0, %v664
  %v666 = vpop.f32.mrb[0].mxu0
  %v667 = vpop.f32.mrb[0].mxu0
  %v668 = vadd.f32 0.0, %v667
  %v669 = vpop.f32.mrb[0].mxu0
  %670 = vdwg.mxu0
  %v671 = vmax.f32 %v657, 0.0
  %v672 = vmax.f32 %v660, 0.0
  %v673 = vmax.f32 %v665, 0.0
  %v674 = vmax.f32 %v668, 0.0
  %vm679 = vcmask 1046528
  %v680 = vrot.slane %v671, 1
  %v681 = vrot.slane %v672, 1
  %v682 = vsel %vm679, %v680, %v681
  %v683 = vrot.slane %v673, 1
  %v684 = vsel %vm679, %v681, %v683
  %v685 = vrot.slane %v674, 1
  %v686 = vsel %vm679, %v683, %v685
  %v691 = vmax.f32 %v671, %v682
  %v692 = vmax.f32 %v672, %v684
  %v693 = vmax.f32 %v673, %v686
  %v694 = vmax.f32 %v674, %v685
  %699 = vrot.lane.b32.xlu0 %v691, 127
  %v700 = vpop.permute.xlu0 %699
  %701 = vrot.lane.b32.xlu0 %v692, 127
  %v702 = vpop.permute.xlu0 %701
  %703 = vrot.lane.b32.xlu0 %v693, 127
  %v704 = vpop.permute.xlu0 %703
  %705 = vrot.lane.b32.xlu0 %v694, 127
  %v706 = vpop.permute.xlu0 %705
  %v711 = vmax.f32 %v691, %v700
  %v712 = vmax.f32 %v692, %v702
  %v713 = vmax.f32 %v693, %v704
  %v714 = vmax.f32 %v694, %v706
  %v715 = vpack.c.bf16 %v712, %v711
  %v716 = vpack.c.bf16 %v714, %v713
  %vm717 = vcmask 777216
  %v720 = vsel %vm717, %v715, 0
  %v722 = vsel %vm717, %v716, 0
  %vm724 = vcmask 1047552
  %vm725 = vmand %vm724, %vm102
  %v726 = vsel %vm725, %v722, 0
  %v729 = vrot.slane %v720, 1
  %v730 = vrot.slane %v726, 1
  %731 = vrot.lane.b32.xlu0 %v729, 96
  %v732 = vpop.permute.xlu0 %731
  %733 = vrot.lane.b32.xlu0 %v730, 96
  %v734 = vpop.permute.xlu0 %733
  %v735 = vrot.slane %v720, 2
  %v736 = vrot.slane %v726, 2
  %737 = vrot.lane.b32.xlu0 %v735, 64
  %v738 = vpop.permute.xlu0 %737
  %739 = vrot.lane.b32.xlu0 %v736, 64
  %v740 = vpop.permute.xlu0 %739
  %v741 = vrot.slane %v720, 3
  %v742 = vrot.slane %v726, 3
  %743 = vrot.lane.b32.xlu0 %v741, 32
  %v744 = vpop.permute.xlu0 %743
  %745 = vrot.lane.b32.xlu0 %v742, 32
  %v746 = vpop.permute.xlu0 %745
  %v747 = vrot.slane %v720, 4
  %v748 = vrot.slane %v726, 4
  %v750 = vsel %vm451, %v720, %v732
  %v753 = vsel %vm451, %v726, %v734
  %v755 = vsel %vm441, %v732, %v738
  %v757 = vsel %vm441, %v734, %v740
  %v759 = vsel %vm431, %v738, %v744
  %v761 = vsel %vm431, %v740, %v746
  %v763 = vsel %vm451, %v747, 1065369472
  %v765 = vsel %vm451, %v748, 1065369472
  %v774 = vunpack.c.l.b16 %v750
  %v775 = vunpack.c.l.b16 %v755
  %v776 = vunpack.c.l.b16 %v759
  %v777 = vunpack.c.l.b16 %v763
  %v778 = vunpack.c.l.b16 %v753
  %v779 = vunpack.c.l.b16 %v757
  %v780 = vunpack.c.l.b16 %v761
  %v781 = vunpack.c.l.b16 %v765
  %v782 = vld [vmem:[%s2] sm:$0xf]
  %v783 = vld [vmem:[%s2 + $0x4] sm:$0xf]
  %v784 = vld [vmem:[%s2 + $0x8] sm:$0xf]
  %v785 = vld [vmem:[%s2 + $0xc] sm:$0xf]
  %v786 = vld [vmem:[%s2 + $0x10] sm:$0xf]
  %v787 = vld [vmem:[%s2 + $0x14] sm:$0xf]
  %v788 = vld [vmem:[%s2 + $0x18] sm:$0xf]
  %v789 = vld [vmem:[%s2 + $0x1c] sm:$0xf]
  %v790 = vld [vmem:[%s2 + $0x20] sm:$0xf]
  %v791 = vld [vmem:[%s2 + $0x24] sm:$0xf]
  %v792 = vld [vmem:[%s2 + $0x28] sm:$0xf]
  %v793 = vld [vmem:[%s2 + $0x2c] sm:$0xf]
  %v794 = vld [vmem:[%s2 + $0x30] sm:$0xf]
  %v795 = vld [vmem:[%s2 + $0x34] sm:$0xf]
  %v796 = vld [vmem:[%s2 + $0x38] sm:$0xf]
  %v797 = vld [vmem:[%s2 + $0x3c] sm:$0xf]
  %v798 = vld [vmem:[%s2 + $0x40] sm:$0xf]
  %v799 = vld [vmem:[%s2 + $0x44] sm:$0xf]
  %v800 = vld [vmem:[%s2 + $0x48] sm:$0xf]
  %v801 = vld [vmem:[%s2 + $0x4c] sm:$0xf]
  %v802 = vld [vmem:[%s2 + $0x50] sm:$0xf]
  %v803 = vld [vmem:[%s2 + $0x54] sm:$0xf]
  %v804 = vld [vmem:[%s2 + $0x58] sm:$0xf]
  %v805 = vld [vmem:[%s2 + $0x5c] sm:$0xf]
  %v806 = vld [vmem:[%s2 + $0x60] sm:$0xf]
  %v807 = vld [vmem:[%s2 + $0x64] sm:$0xf]
  %v808 = vld [vmem:[%s2 + $0x68] sm:$0xf]
  %v809 = vld [vmem:[%s2 + $0x6c] sm:$0xf]
  %v810 = vld [vmem:[%s2 + $0x70] sm:$0xf]
  %v811 = vld [vmem:[%s2 + $0x74] sm:$0xf]
  %v812 = vld [vmem:[%s2 + $0x78] sm:$0xf]
  %v813 = vld [vmem:[%s2 + $0x7c] sm:$0xf]
  %v814 = vld [vmem:[%s2 + $0x80] sm:$0xf]
  %v815 = vld [vmem:[%s2 + $0x84] sm:$0xf]
  %v816 = vld [vmem:[%s2 + $0x88] sm:$0xf]
  %v817 = vld [vmem:[%s2 + $0x8c] sm:$0xf]
  %v818 = vld [vmem:[%s2 + $0x90] sm:$0xf]
  %v819 = vld [vmem:[%s2 + $0x94] sm:$0xf]
  %v820 = vld [vmem:[%s2 + $0x98] sm:$0xf]
  %v821 = vld [vmem:[%s2 + $0x9c] sm:$0xf]
  %v822 = vld [vmem:[%s2 + $0xa0] sm:$0xf]
  %v823 = vld [vmem:[%s2 + $0xa4] sm:$0xf]
  %v824 = vld [vmem:[%s2 + $0xa8] sm:$0xf]
  %v825 = vld [vmem:[%s2 + $0xac] sm:$0xf]
  %v826 = vld [vmem:[%s2 + $0xb0] sm:$0xf]
  %v827 = vld [vmem:[%s2 + $0xb4] sm:$0xf]
  %v828 = vld [vmem:[%s2 + $0xb8] sm:$0xf]
  %v829 = vld [vmem:[%s2 + $0xbc] sm:$0xf]
  %v830 = vld [vmem:[%s2 + $0xc0] sm:$0xf]
  %v831 = vld [vmem:[%s2 + $0xc4] sm:$0xf]
  %v832 = vld [vmem:[%s2 + $0xc8] sm:$0xf]
  %v833 = vld [vmem:[%s2 + $0xcc] sm:$0xf]
  %v834 = vld [vmem:[%s2 + $0xd0] sm:$0xf]
  %v835 = vld [vmem:[%s2 + $0xd4] sm:$0xf]
  %v836 = vld [vmem:[%s2 + $0xd8] sm:$0xf]
  %v837 = vld [vmem:[%s2 + $0xdc] sm:$0xf]
  %v838 = vld [vmem:[%s2 + $0xe0] sm:$0xf]
  %v839 = vld [vmem:[%s2 + $0xe4] sm:$0xf]
  %v840 = vld [vmem:[%s2 + $0xe8] sm:$0xf]
  %v841 = vld [vmem:[%s2 + $0xec] sm:$0xf]
  %v842 = vld [vmem:[%s2 + $0xf0] sm:$0xf]
  %v843 = vld [vmem:[%s2 + $0xf4] sm:$0xf]
  %v844 = vpack.c.b16 %v778, %v774
  %v845 = vpack.c.b16 %v779, %v775
  %v846 = vpack.c.b16 %v780, %v776
  %v847 = vpack.c.b16 %v781, %v777
  %v913 = vunpack.c.l.b16 %v782
  %v914 = vunpack.c.l.b16 %v783
  %v915 = vunpack.c.l.b16 %v784
  %v916 = vunpack.c.l.b16 %v785
  %v917 = vunpack.c.l.b16 %v786
  %v918 = vunpack.c.l.b16 %v787
  %v919 = vunpack.c.l.b16 %v788
  %v920 = vunpack.c.l.b16 %v789
  %v921 = vunpack.c.l.b16 %v790
  %v922 = vunpack.c.l.b16 %v791
  %v923 = vunpack.c.l.b16 %v792
  %v924 = vunpack.c.l.b16 %v793
  %v925 = vunpack.c.l.b16 %v794
  %v926 = vunpack.c.l.b16 %v795
  %v927 = vunpack.c.l.b16 %v796
  %v928 = vunpack.c.l.b16 %v797
  %v929 = vunpack.c.l.b16 %v798
  %v930 = vunpack.c.l.b16 %v799
  %v931 = vunpack.c.l.b16 %v800
  %v932 = vunpack.c.l.b16 %v801
  %v933 = vunpack.c.l.b16 %v802
  %v934 = vunpack.c.l.b16 %v803
  %v935 = vunpack.c.l.b16 %v804
  %v936 = vunpack.c.l.b16 %v805
  %v937 = vunpack.c.l.b16 %v806
  %v938 = vunpack.c.l.b16 %v807
  %v939 = vunpack.c.l.b16 %v808
  %v940 = vunpack.c.l.b16 %v809
  %v941 = vunpack.c.l.b16 %v810
  %v942 = vunpack.c.l.b16 %v811
  %v943 = vunpack.c.l.b16 %v812
  %v944 = vunpack.c.l.b16 %v813
  %v945 = vunpack.c.l.b16 %v814
  %v946 = vunpack.c.l.b16 %v815
  %v947 = vunpack.c.l.b16 %v816
  %v948 = vunpack.c.l.b16 %v817
  %v949 = vunpack.c.l.b16 %v818
  %v950 = vunpack.c.l.b16 %v819
  %v951 = vunpack.c.l.b16 %v820
  %v952 = vunpack.c.l.b16 %v821
  %v953 = vunpack.c.l.b16 %v822
  %v954 = vunpack.c.l.b16 %v823
  %v955 = vunpack.c.l.b16 %v824
  %v956 = vunpack.c.l.b16 %v825
  %v957 = vunpack.c.l.b16 %v826
  %v958 = vunpack.c.l.b16 %v827
  %v959 = vunpack.c.l.b16 %v828
  %v960 = vunpack.c.l.b16 %v829
  %v961 = vunpack.c.l.b16 %v830
  %v962 = vunpack.c.l.b16 %v831
  %v963 = vunpack.c.l.b16 %v832
  %v964 = vunpack.c.l.b16 %v833
  %v965 = vunpack.c.l.b16 %v834
  %v966 = vunpack.c.l.b16 %v835
  %v967 = vunpack.c.l.b16 %v836
  %v968 = vunpack.c.l.b16 %v837
  %v969 = vunpack.c.l.b16 %v838
  %v970 = vunpack.c.l.b16 %v839
  %v971 = vunpack.c.l.b16 %v840
  %v972 = vunpack.c.l.b16 %v841
  %v973 = vunpack.c.l.b16 %v842
  %v974 = vunpack.c.l.b16 %v843
  %v975 = vpack.c.b16 %v914, %v913
  %v976 = vpack.c.b16 %v916, %v915
  %v977 = vpack.c.b16 %v918, %v917
  %v978 = vpack.c.b16 %v920, %v919
  %v979 = vpack.c.b16 %v922, %v921
  %v980 = vpack.c.b16 %v924, %v923
  %v981 = vpack.c.b16 %v926, %v925
  %v982 = vpack.c.b16 %v928, %v927
  %v983 = vpack.c.b16 %v930, %v929
  %v984 = vpack.c.b16 %v932, %v931
  %v985 = vpack.c.b16 %v934, %v933
  %v986 = vpack.c.b16 %v936, %v935
  %v987 = vpack.c.b16 %v938, %v937
  %v988 = vpack.c.b16 %v940, %v939
  %v989 = vpack.c.b16 %v942, %v941
  %v990 = vpack.c.b16 %v944, %v943
  %v991 = vpack.c.b16 %v946, %v945
  %v992 = vpack.c.b16 %v948, %v947
  %v993 = vpack.c.b16 %v950, %v949
  %v994 = vpack.c.b16 %v952, %v951
  %v995 = vpack.c.b16 %v954, %v953
  %v996 = vpack.c.b16 %v956, %v955
  %v997 = vpack.c.b16 %v958, %v957
  %v998 = vpack.c.b16 %v960, %v959
  %v999 = vpack.c.b16 %v962, %v961
  %v1000 = vpack.c.b16 %v964, %v963
  %v1001 = vpack.c.b16 %v966, %v965
  %v1002 = vpack.c.b16 %v968, %v967
  %v1003 = vpack.c.b16 %v970, %v969
  %v1004 = vpack.c.b16 %v972, %v971
  %v1005 = vpack.c.b16 %v974, %v973
  %v1038 = vsel %vm456, %v847, 0
  %1040 = vmatprep.subr.bf16.mxu0 0
  %1041 = vmatpush1.bf16.msra.mxu0 %v975
  %1042 = vmatprep.subr.bf16.mxu0 0
  %1043 = vmatpush1.bf16.msra.mxu0 %v976
  %1044 = vmatprep.subr.bf16.mxu0 0
  %1045 = vmatpush1.bf16.msra.mxu0 %v977
  %1046 = vmatprep.subr.bf16.mxu0 0
  %1047 = vmatpush1.bf16.msra.mxu0 %v978
  %1048 = vmatprep.subr.bf16.mxu0 0
  %1049 = vmatpush1.bf16.msra.mxu0 %v979
  %1050 = vmatprep.subr.bf16.mxu0 0
  %1051 = vmatpush1.bf16.msra.mxu0 %v980
  %1052 = vmatprep.subr.bf16.mxu0 0
  %1053 = vmatpush1.bf16.msra.mxu0 %v981
  %1054 = vmatprep.subr.bf16.mxu0 0
  %1055 = vmatpush1.bf16.msra.mxu0 %v982
  %1056 = vmatprep.subr.bf16.mxu0 0
  %1057 = vmatpush1.bf16.msra.mxu0 %v983
  %1058 = vmatprep.subr.bf16.mxu0 0
  %1059 = vmatpush1.bf16.msra.mxu0 %v984
  %1060 = vmatprep.subr.bf16.mxu0 0
  %1061 = vmatpush1.bf16.msra.mxu0 %v985
  %1062 = vmatprep.subr.bf16.mxu0 0
  %1063 = vmatpush1.bf16.msra.mxu0 %v986
  %1064 = vmatprep.subr.bf16.mxu0 0
  %1065 = vmatpush1.bf16.msra.mxu0 %v987
  %1066 = vmatprep.subr.bf16.mxu0 0
  %1067 = vmatpush1.bf16.msra.mxu0 %v988
  %1068 = vmatprep.subr.bf16.mxu0 0
  %1069 = vmatpush1.bf16.msra.mxu0 %v989
  %1070 = vmatprep.subr.bf16.mxu0 0
  %1071 = vmatpush1.bf16.msra.mxu0 %v990
  %1072 = vmatprep.mubr.bf16.mxu0 %v845
  %1073 = vmatmul.mubr.bf16.gmra.mrb[0].mxu0 %v844
  %v1074 = vpop.f32.mrb[0].mxu0
  %v1075 = vadd.f32 0.0, %v1074
  %v1076 = vpop.f32.mrb[0].mxu0
  %v1077 = vpop.f32.mrb[0].mxu0
  %v1078 = vadd.f32 0.0, %v1077
  %v1079 = vpop.f32.mrb[0].mxu0
  %1080 = vdwg.mxu0
  %1081 = vmatprep.subr.bf16.mxu0 0
  %1082 = vmatpush1.bf16.msra.mxu0 %v991
  %1083 = vmatprep.subr.bf16.mxu0 0
  %1084 = vmatpush1.bf16.msra.mxu0 %v992
  %1085 = vmatprep.subr.bf16.mxu0 0
  %1086 = vmatpush1.bf16.msra.mxu0 %v993
  %1087 = vmatprep.subr.bf16.mxu0 0
  %1088 = vmatpush1.bf16.msra.mxu0 %v994
  %1089 = vmatprep.subr.bf16.mxu0 0
  %1090 = vmatpush1.bf16.msra.mxu0 %v995
  %1091 = vmatprep.subr.bf16.mxu0 0
  %1092 = vmatpush1.bf16.msra.mxu0 %v996
  %1093 = vmatprep.subr.bf16.mxu0 0
  %1094 = vmatpush1.bf16.msra.mxu0 %v997
  %1095 = vmatprep.subr.bf16.mxu0 0
  %1096 = vmatpush1.bf16.msra.mxu0 %v998
  %1097 = vmatprep.subr.bf16.mxu0 0
  %1098 = vmatpush1.bf16.msra.mxu0 %v999
  %1099 = vmatprep.subr.bf16.mxu0 0
  %1100 = vmatpush1.bf16.msra.mxu0 %v1000
  %1101 = vmatprep.subr.bf16.mxu0 0
  %1102 = vmatpush1.bf16.msra.mxu0 %v1001
  %1103 = vmatprep.subr.bf16.mxu0 0
  %1104 = vmatpush1.bf16.msra.mxu0 %v1002
  %1105 = vmatprep.subr.bf16.mxu0 0
  %1106 = vmatpush1.bf16.msra.mxu0 %v1003
  %1107 = vmatprep.subr.bf16.mxu0 0
  %1108 = vmatpush1.bf16.msra.mxu0 %v1004
  %1109 = vmatprep.subr.bf16.mxu0 0
  %1110 = vmatpush1.bf16.msra.mxu0 %v1005
  %1111 = vmatprep.subr.bf16.mxu0 0
  %1112 = vmatpush1.bf16.msra.mxu0 0
  %1113 = vmatprep.mubr.bf16.mxu0 %v1038
  %1114 = vmatmul.mubr.bf16.gmra.mrb[0].mxu0 %v846
  %v1115 = vpop.f32.mrb[0].mxu0
  %v1116 = vadd.f32 %v1075, %v1115
  %v1117 = vpop.f32.mrb[0].mxu0
  %v1118 = vpop.f32.mrb[0].mxu0
  %v1119 = vadd.f32 %v1078, %v1118
  %v1120 = vpop.f32.mrb[0].mxu0
  %1121 = vdwg.mxu0
  %v1122 = vmax.f32 %v1116, 0.0
  %v1123 = vmax.f32 %v1119, 0.0
  %vm1126 = vcmask 1045504
  %v1127 = vrot.slane %v1122, 2
  %v1128 = vrot.slane %v1123, 2
  %v1129 = vsel %vm1126, %v1127, %v1128
  %v1132 = vmax.f32 %v1122, %v1129
  %v1133 = vmax.f32 %v1123, %v1128
  %1136 = vrot.lane.b32.xlu0 %v1132, 127
  %v1137 = vpop.permute.xlu0 %1136
  %1138 = vrot.lane.b32.xlu0 %v1133, 127
  %v1139 = vpop.permute.xlu0 %1138
  %v1142 = vmax.f32 %v1132, %v1137
  %v1143 = vmax.f32 %v1133, %v1139
  %vm1144 = vcmask 252928
  %v1145 = vsel %vm1144, %v1142, 1.0
  %v1146 = vsel %vm1144, %v1143, 1.0
  %v1147 = vsel %vm1126, %v1146, 0.0
  %v1148 = vpack.c.bf16 %v1147, %v1145
  %v1149 = vld [vmem:[%s3] sm:$0xf]
  %v1150 = vld [vmem:[%s3 + $0x4] sm:$0xf]
  %v1151 = vld [vmem:[%s3 + $0x8] sm:$0xf]
  %v1152 = vld [vmem:[%s3 + $0xc] sm:$0xf]
  %v1157 = vunpack.c.l.b16 %v1149
  %v1158 = vunpack.c.l.b16 %v1150
  %v1159 = vunpack.c.l.b16 %v1151
  %v1160 = vunpack.c.l.b16 %v1152
  %v1161 = vpack.c.b16 %v1158, %v1157
  %v1162 = vpack.c.b16 %v1160, %v1159
  %v1166 = vsel %vm431, %v1148, 0
  %1168 = vmatprep.subr.bf16.mxu0 0
  %1169 = vmatpush1.bf16.msra.mxu0 %v1161
  %1170 = vmatprep.subr.bf16.mxu0 0
  %1171 = vmatpush1.bf16.msra.mxu0 %v1162
  %1172 = vmatprep.subr.bf16.mxu0 0
  %1173 = vmatpush1.bf16.msra.mxu0 0
  %1174 = vmatprep.subr.bf16.mxu0 0
  %1175 = vmatpush1.bf16.msra.mxu0 0
  %1176 = vmatprep.subr.bf16.mxu0 0
  %1177 = vmatpush1.bf16.msra.mxu0 0
  %1178 = vmatprep.subr.bf16.mxu0 0
  %1179 = vmatpush1.bf16.msra.mxu0 0
  %1180 = vmatprep.subr.bf16.mxu0 0
  %1181 = vmatpush1.bf16.msra.mxu0 0
  %1182 = vmatprep.subr.bf16.mxu0 0
  %1183 = vmatpush1.bf16.msra.mxu0 0
  %1184 = vmatprep.subr.bf16.mxu0 0
  %1185 = vmatpush1.bf16.msra.mxu0 0
  %1186 = vmatprep.subr.bf16.mxu0 0
  %1187 = vmatpush1.bf16.msra.mxu0 0
  %1188 = vmatprep.subr.bf16.mxu0 0
  %1189 = vmatpush1.bf16.msra.mxu0 0
  %1190 = vmatprep.subr.bf16.mxu0 0
  %1191 = vmatpush1.bf16.msra.mxu0 0
  %1192 = vmatprep.subr.bf16.mxu0 0
  %1193 = vmatpush1.bf16.msra.mxu0 0
  %1194 = vmatprep.subr.bf16.mxu0 0
  %1195 = vmatpush1.bf16.msra.mxu0 0
  %1196 = vmatprep.subr.bf16.mxu0 0
  %1197 = vmatpush1.bf16.msra.mxu0 0
  %1198 = vmatprep.subr.bf16.mxu0 0
  %1199 = vmatpush1.bf16.msra.mxu0 0
  %1200 = vmatprep.mubr.bf16.mxu0 0
  %1201 = vmatmul.mubr.bf16.gmra.mrb[0].mxu0 %v1166
  %v1202 = vpop.f32.mrb[0].mxu0
  %v1203 = vadd.f32 0.0, %v1202
  %v1204 = vpop.f32.mrb[0].mxu0
  %v1205 = vpop.f32.mrb[0].mxu0
  %v1206 = vadd.f32 0.0, %v1205
  %v1207 = vpop.f32.mrb[0].mxu0
  %1208 = vdwg.mxu0
  %v1209 = vmax.f32 %v1203, 0.0
  %v1210 = vmax.f32 %v1206, 0.0
  %v1211 = vpack.c.bf16 %v1210, %v1209
  %v1212 = vld [vmem:[%s4] sm:$0xf]
  %v1213 = vld [vmem:[%s4 + $0x4] sm:$0xf]
  %v1214 = vld [vmem:[%s4 + $0x8] sm:$0xf]
  %v1215 = vld [vmem:[%s4 + $0xc] sm:$0xf]
  %v1216 = vld [vmem:[%s4 + $0x10] sm:$0xf]
  %v1217 = vld [vmem:[%s4 + $0x14] sm:$0xf]
  %v1224 = vunpack.c.l.b16 %v1212
  %v1225 = vunpack.c.l.b16 %v1213
  %v1226 = vunpack.c.l.b16 %v1214
  %v1227 = vunpack.c.l.b16 %v1215
  %v1228 = vunpack.c.l.b16 %v1216
  %v1229 = vunpack.c.l.b16 %v1217
  %v1230 = vpack.c.b16 %v1225, %v1224
  %v1231 = vpack.c.b16 %v1227, %v1226
  %v1232 = vpack.c.b16 %v1229, %v1228
  %v1237 = vsel %vm436, %v1211, 0
  %1239 = vmatprep.subr.bf16.mxu0 0
  %1240 = vmatpush1.bf16.msra.mxu0 %v1230
  %1241 = vmatprep.subr.bf16.mxu0 0
  %1242 = vmatpush1.bf16.msra.mxu0 %v1231
  %1243 = vmatprep.subr.bf16.mxu0 0
  %1244 = vmatpush1.bf16.msra.mxu0 %v1232
  %1245 = vmatprep.subr.bf16.mxu0 0
  %1246 = vmatpush1.bf16.msra.mxu0 0
  %1247 = vmatprep.subr.bf16.mxu0 0
  %1248 = vmatpush1.bf16.msra.mxu0 0
  %1249 = vmatprep.subr.bf16.mxu0 0
  %1250 = vmatpush1.bf16.msra.mxu0 0
  %1251 = vmatprep.subr.bf16.mxu0 0
  %1252 = vmatpush1.bf16.msra.mxu0 0
  %1253 = vmatprep.subr.bf16.mxu0 0
  %1254 = vmatpush1.bf16.msra.mxu0 0
  %1255 = vmatprep.subr.bf16.mxu0 0
  %1256 = vmatpush1.bf16.msra.mxu0 0
  %1257 = vmatprep.subr.bf16.mxu0 0
  %1258 = vmatpush1.bf16.msra.mxu0 0
  %1259 = vmatprep.subr.bf16.mxu0 0
  %1260 = vmatpush1.bf16.msra.mxu0 0
  %1261 = vmatprep.subr.bf16.mxu0 0
  %1262 = vmatpush1.bf16.msra.mxu0 0
  %1263 = vmatprep.subr.bf16.mxu0 0
  %1264 = vmatpush1.bf16.msra.mxu0 0
  %1265 = vmatprep.subr.bf16.mxu0 0
  %1266 = vmatpush1.bf16.msra.mxu0 0
  %1267 = vmatprep.subr.bf16.mxu0 0
  %1268 = vmatpush1.bf16.msra.mxu0 0
  %1269 = vmatprep.subr.bf16.mxu0 0
  %1270 = vmatpush1.bf16.msra.mxu0 0
  %1271 = vmatprep.mubr.bf16.mxu0 0
  %1272 = vmatmul.mubr.bf16.gmra.mrb[0].mxu0 %v1237
  %v1273 = vpop.f32.mrb[0].mxu0
  %v1274 = vadd.f32 0.0, %v1273
  %v1275 = vpop.f32.mrb[0].mxu0
  %v1276 = vpop.f32.mrb[0].mxu0
  %v1277 = vadd.f32 0.0, %v1276
  %v1278 = vpop.f32.mrb[0].mxu0
  %1279 = vdwg.mxu0
  %1282 = vrot.lane.b32.xlu0 %v1274, 32
  %v1283 = vpop.permute.xlu0 %1282
  %1284 = vrot.lane.b32.xlu0 %v1277, 32
  %v1285 = vpop.permute.xlu0 %1284
  %v1288 = vsel %vm431, %v1209, %v1283
  %v1289 = vsel %vm431, %v1210, %v1285
  %1290 = vst.msk [vmem:[%s5] sm:$0xff] %vm441, %v1288
  %1291 = vst.msk [vmem:[%s5 + $0x8] sm:$0xff] %vm441, %v1289
  // Predicated region
  $region22: #{local_model_forward.1} parent=0 // pred_check
    _
  $region23: #{local_model_forward.1} parent=0 // pred_check_branch
    %1293 = sbr.rel (0) target = $region25
  $region24: #{local_model_forward.1} parent=0 // pred_region
    _
  $region25: #{local_model_forward.1} parent=0 // pred_fallthru
    _
  // Predicated region
  $region26: #{local_model_forward.1} parent=0 // pred_check
    _
  $region27: #{local_model_forward.1} parent=0 // pred_check_branch
    %1295 = sbr.rel (0) target = $region29
  $region28: #{local_model_forward.1} parent=0 // pred_region
    _
  $region29: #{local_model_forward.1} parent=0 // pred_fallthru
    _

</llo_original>
